<compile_context>
chip_gen: v7x
topology: tpu7x:2x2x1
jax: 0.10.0
libtpu: 0.0.40
codegen_flags: <defaults>
</compile_context>

<pallas_src>
import math
from functools import partial

import jax
import jax.numpy as jnp
from jax import lax
from jax.experimental import pallas as pl
from jax.experimental.pallas import tpu as pltpu

_MASK_FILL = float(-(1 << 32))  # torch masked_fill value


def _round_up(x, m):
    return ((x + m - 1) // m) * m


def _agger_kernel(main_ref, other_ref, wqt_ref, bq_ref, wkt_ref, bk_ref,
                  bias_ref, o_ref, *, inv_sqrt_mid):
    # Q = (main @ Wq^T + bq) / sqrt(mid)            [TN, mid]  (scale folded in)
    q = jnp.dot(main_ref[...], wqt_ref[...], preferred_element_type=jnp.float32)
    q = (q + bq_ref[...]) * inv_sqrt_mid

    # K = other @ Wk^T + bk                         [M, mid]
    k = jnp.dot(other_ref[...], wkt_ref[...], preferred_element_type=jnp.float32)
    k = k + bk_ref[...]

    # logits = Q K^T + additive mask bias           [TN, M]  (single vadd mask)
    attn = lax.dot_general(q, k, (((1,), (1,)), ((), ())),
                           preferred_element_type=jnp.float32)
    attn = attn + bias_ref[...]

    # numerically stable row softmax in f32; EUP approximate reciprocal.
    attn = attn - jnp.max(attn, axis=-1, keepdims=True)
    p = jnp.exp(attn)
    p = p * pl.reciprocal(jnp.sum(p, axis=-1, keepdims=True), approx=True)

    # O = softmax(logits) @ other                   [TN, Kdim]
    o_ref[...] = jnp.dot(p.astype(other_ref.dtype), other_ref[...],
                         preferred_element_type=jnp.float32).astype(o_ref.dtype)


def adj_atten_agger(main_feat, other_feat, wq, bq, wk, bk, mask, *, tn=128):
    """AdjAttenAgger.forward:
       softmax(((main Wq^T + bq)(other Wk^T + bk)^T) / sqrt(mid), mask) @ other."""
    N, Qdim = main_feat.shape
    M, Kdim = other_feat.shape
    mid = wq.shape[0]

    # Row-tile size (sublane multiple).  Grid over N so the work pipelines and,
    # on v7x, shards across both TensorCores via the "parallel" axis.
    tn = _round_up(min(tn, _round_up(N, 8)), 8)
    n_pad = _round_up(N, tn)

    # MXU operands in bf16 (f32 accumulation); weights pre-transposed once so
    # every linear is a standard [m,k]x[k,n] contraction (no in-kernel vxpose).
    main_p = main_feat.astype(jnp.bfloat16)
    other_p = other_feat.astype(jnp.bfloat16)
    wqt = wq.T.astype(jnp.bfloat16)                    # [Qdim, mid]
    wkt = wk.T.astype(jnp.bfloat16)                    # [Kdim, mid]
    bq2 = bq.reshape(1, mid).astype(jnp.float32)
    bk2 = bk.reshape(1, mid).astype(jnp.float32)

    # Single additive mask bias: 0 (attend) / -2^32 (torch masked_fill value).
    bias = jnp.where(mask, jnp.float32(_MASK_FILL), jnp.float32(0.0))

    if n_pad != N:
        main_p = jnp.pad(main_p, ((0, n_pad - N), (0, 0)))
        bias = jnp.pad(bias, ((0, n_pad - N), (0, 0)))

    grid = (n_pad // tn,)

    # Per-step working-set estimate -> explicit VMEM budget (clamped so it is
    # safe on v7x's 64 MiB physical VMEM as well as v5e/v6e).
    est = 2 * (tn * Qdim * 2 + tn * M * 4 + tn * Kdim * 4)                # tiled blocks, 2-deep
    est += M * Kdim * 2 + Qdim * mid * 2 + Kdim * mid * 2 + 2 * mid * 4   # pinned blocks
    est += tn * mid * 4 + M * mid * 4 + 3 * tn * M * 4 + tn * Kdim * 4    # intermediates
    vmem_limit = int(min(32 * 1024 * 1024, max(4 * 1024 * 1024, 4 * est)))

    pinned = lambda i: (0, 0)
    rowtile = lambda i: (i, 0)

    out = pl.pallas_call(
        partial(_agger_kernel, inv_sqrt_mid=1.0 / math.sqrt(mid)),
        grid_spec=pltpu.PrefetchScalarGridSpec(
            num_scalar_prefetch=0,
            grid=grid,
            in_specs=[
                pl.BlockSpec((tn, Qdim), rowtile),   # main rows (tiled over N)
                pl.BlockSpec((M, Kdim), pinned),     # other_feat (K and V), resident
                pl.BlockSpec((Qdim, mid), pinned),   # Wq^T, resident
                pl.BlockSpec((1, mid), pinned),      # bq
                pl.BlockSpec((Kdim, mid), pinned),   # Wk^T, resident
                pl.BlockSpec((1, mid), pinned),      # bk
                pl.BlockSpec((tn, M), rowtile),      # additive mask bias (tiled over N)
            ],
            out_specs=pl.BlockSpec((tn, Kdim), rowtile),
        ),
        out_shape=jax.ShapeDtypeStruct((n_pad, Kdim), jnp.float32),
        compiler_params=pltpu.CompilerParams(
            dimension_semantics=("parallel",),
            vmem_limit_bytes=vmem_limit,
        ),
    )(main_p, other_p, wqt, bq2, wkt, bk2, bias)

    return out[:N] if n_pad != N else out


def _reference(main_feat, other_feat, wq, bq, wk, bk, mask):
    Q = main_feat @ wq.T + bq
    K = other_feat @ wk.T + bk
    attn = (Q @ K.T) / math.sqrt(wq.shape[0])
    attn = jnp.where(mask, jnp.float32(_MASK_FILL), attn)
    attn = jax.nn.softmax(attn, axis=-1)
    return attn @ other_feat


if __name__ == "__main__":
    # Shapes consistent with Img_align's aggregator: Qdim = Kdim = mid = emb_dim.
    N, M, emb_dim = 16, 16, 32
    Qdim = Kdim = mid_dim = emb_dim

    key = jax.random.PRNGKey(0)
    k_main, k_other, k_wq, k_bq, k_wk, k_bk, k_mask = jax.random.split(key, 7)

    main_feat = jax.random.normal(k_main, (N, Qdim), dtype=jnp.float32)
    other_feat = jax.random.normal(k_other, (M, Kdim), dtype=jnp.float32)

    # torch nn.Linear-style init: uniform(-1/sqrt(in), 1/sqrt(in))
    bound_q = 1.0 / math.sqrt(Qdim)
    bound_k = 1.0 / math.sqrt(Kdim)
    wq = jax.random.uniform(k_wq, (mid_dim, Qdim), jnp.float32, -bound_q, bound_q)
    bq = jax.random.uniform(k_bq, (mid_dim,), jnp.float32, -bound_q, bound_q)
    wk = jax.random.uniform(k_wk, (mid_dim, Kdim), jnp.float32, -bound_k, bound_k)
    bk = jax.random.uniform(k_bk, (mid_dim,), jnp.float32, -bound_k, bound_k)

    # equivalent of torch.logical_not(sub_projection_matrix > 0)
    mask = jax.random.bernoulli(k_mask, 0.25, (N, M))

    # tn=8 -> grid of 2 row-tiles, exercising the pipelined/parallel grid path.
    run = jax.jit(partial(adj_atten_agger, tn=8))
    out = jax.block_until_ready(run(main_feat, other_feat, wq, bq, wk, bk, mask))

    ref = _reference(main_feat, other_feat, wq, bq, wk, bk, mask)
    assert out.shape == (N, Kdim)
    # Tolerance covers bf16 MXU operands (f32 accumulation) and the EUP
    # approximate reciprocal in the softmax denominator.
    assert jnp.allclose(out, ref, atol=2e-2, rtol=2e-2), "mismatch vs reference"

    print("KERNEL_OK")
</pallas_src>

<mosaic_0001>
module attributes {stable_mosaic.version = 11 : i64} {
  func.func @_agger_kernel(%arg0: i32, %arg1: memref<8x32xbf16, #tpu.memory_space<vmem>>, %arg2: memref<16x32xbf16, #tpu.memory_space<vmem>>, %arg3: memref<32x32xbf16, #tpu.memory_space<vmem>>, %arg4: memref<1x32xf32, #tpu.memory_space<vmem>>, %arg5: memref<32x32xbf16, #tpu.memory_space<vmem>>, %arg6: memref<1x32xf32, #tpu.memory_space<vmem>>, %arg7: memref<8x16xf32, #tpu.memory_space<vmem>>, %arg8: memref<8x32xf32, #tpu.memory_space<vmem>>) attributes {dimension_semantics = [#tpu.dimension_semantics<parallel>], iteration_bounds = array<i64: 2>, scalar_prefetch = 0 : i64, scratch_operands = 0 : i64, tpu.core_type = #tpu.core_type<tc>, window_params = [{transform_indices = @transform_0, window_bounds = array<i64: 8, 32>}, {pipeline_mode = #tpu.pipeline_mode<synchronous>, transform_indices = @transform_1, window_bounds = array<i64: 16, 32>}, {pipeline_mode = #tpu.pipeline_mode<synchronous>, transform_indices = @transform_2, window_bounds = array<i64: 32, 32>}, {pipeline_mode = #tpu.pipeline_mode<synchronous>, transform_indices = @transform_3, window_bounds = array<i64: 1, 32>}, {pipeline_mode = #tpu.pipeline_mode<synchronous>, transform_indices = @transform_4, window_bounds = array<i64: 32, 32>}, {pipeline_mode = #tpu.pipeline_mode<synchronous>, transform_indices = @transform_5, window_bounds = array<i64: 1, 32>}, {transform_indices = @transform_6, window_bounds = array<i64: 8, 16>}, {transform_indices = @transform_7, window_bounds = array<i64: 8, 32>}]} {
    %c0 = arith.constant 0 : index
    %c0_0 = arith.constant 0 : index
    %0 = vector.load %arg1[%c0, %c0_0] : memref<8x32xbf16, #tpu.memory_space<vmem>>, vector<8x32xbf16>
    %c0_1 = arith.constant 0 : index
    %c0_2 = arith.constant 0 : index
    %1 = vector.load %arg3[%c0_1, %c0_2] : memref<32x32xbf16, #tpu.memory_space<vmem>>, vector<32x32xbf16>
    %cst = arith.constant dense<0.000000e+00> : vector<8x32xf32>
    %2 = tpu.matmul %0, %1, %cst {dimension_numbers = #tpu.dot_dimension_numbers<[1], [0], [0], [1], [0, 0, 1, 1], [], []>} : vector<8x32xbf16>, vector<32x32xbf16>, vector<8x32xf32> -> vector<8x32xf32>
    %c0_3 = arith.constant 0 : index
    %c0_4 = arith.constant 0 : index
    %3 = vector.load %arg4[%c0_3, %c0_4] : memref<1x32xf32, #tpu.memory_space<vmem>>, vector<1x32xf32>
    %4 = vector.broadcast %3 : vector<1x32xf32> to vector<8x32xf32>
    %5 = arith.addf %2, %4 : vector<8x32xf32>
    %cst_5 = arith.constant 0.176776692 : f32
    %6 = vector.broadcast %cst_5 : f32 to vector<8x32xf32>
    %7 = arith.mulf %5, %6 : vector<8x32xf32>
    %c0_6 = arith.constant 0 : index
    %c0_7 = arith.constant 0 : index
    %8 = vector.load %arg2[%c0_6, %c0_7] : memref<16x32xbf16, #tpu.memory_space<vmem>>, vector<16x32xbf16>
    %c0_8 = arith.constant 0 : index
    %c0_9 = arith.constant 0 : index
    %9 = vector.load %arg5[%c0_8, %c0_9] : memref<32x32xbf16, #tpu.memory_space<vmem>>, vector<32x32xbf16>
    %cst_10 = arith.constant dense<0.000000e+00> : vector<16x32xf32>
    %10 = tpu.matmul %8, %9, %cst_10 {dimension_numbers = #tpu.dot_dimension_numbers<[1], [0], [0], [1], [0, 0, 1, 1], [], []>} : vector<16x32xbf16>, vector<32x32xbf16>, vector<16x32xf32> -> vector<16x32xf32>
    %c0_11 = arith.constant 0 : index
    %c0_12 = arith.constant 0 : index
    %11 = vector.load %arg6[%c0_11, %c0_12] : memref<1x32xf32, #tpu.memory_space<vmem>>, vector<1x32xf32>
    %12 = vector.broadcast %11 : vector<1x32xf32> to vector<16x32xf32>
    %13 = arith.addf %10, %12 : vector<16x32xf32>
    %cst_13 = arith.constant dense<0.000000e+00> : vector<8x16xf32>
    %14 = tpu.matmul %7, %13, %cst_13 {dimension_numbers = #tpu.dot_dimension_numbers<[1], [1], [0], [0], [0, 0, 1, 0], [], []>} : vector<8x32xf32>, vector<16x32xf32>, vector<8x16xf32> -> vector<8x16xf32>
    %c0_14 = arith.constant 0 : index
    %c0_15 = arith.constant 0 : index
    %15 = vector.load %arg7[%c0_14, %c0_15] : memref<8x16xf32, #tpu.memory_space<vmem>>, vector<8x16xf32>
    %16 = arith.addf %14, %15 : vector<8x16xf32>
    %cst_16 = arith.constant dense<0xFF800000> : vector<8xf32>
    %17 = vector.multi_reduction <maximumf>, %16, %cst_16 [1] : vector<8x16xf32> to vector<8xf32>
    %18 = vector.shape_cast %17 : vector<8xf32> to vector<8x1xf32>
    %19 = vector.broadcast %18 : vector<8x1xf32> to vector<8x16xf32>
    %20 = arith.subf %16, %19 : vector<8x16xf32>
    %21 = math.exp %20 : vector<8x16xf32>
    %cst_17 = arith.constant dense<0.000000e+00> : vector<8xf32>
    %22 = vector.multi_reduction <add>, %21, %cst_17 [1] : vector<8x16xf32> to vector<8xf32>
    %23 = vector.shape_cast %22 : vector<8xf32> to vector<8x1xf32>
    %24 = tpu.reciprocal %23 {approx = true} : vector<8x1xf32> -> vector<8x1xf32>
    %25 = vector.broadcast %24 : vector<8x1xf32> to vector<8x16xf32>
    %26 = arith.mulf %21, %25 : vector<8x16xf32>
    %27 = arith.truncf %26 : vector<8x16xf32> to vector<8x16xbf16>
    %c0_18 = arith.constant 0 : index
    %c0_19 = arith.constant 0 : index
    %28 = vector.load %arg2[%c0_18, %c0_19] : memref<16x32xbf16, #tpu.memory_space<vmem>>, vector<16x32xbf16>
    %cst_20 = arith.constant dense<0.000000e+00> : vector<8x32xf32>
    %29 = tpu.matmul %27, %28, %cst_20 {dimension_numbers = #tpu.dot_dimension_numbers<[1], [0], [0], [1], [0, 0, 1, 1], [], []>} : vector<8x16xbf16>, vector<16x32xbf16>, vector<8x32xf32> -> vector<8x32xf32>
    %c0_21 = arith.constant 0 : index
    %c0_22 = arith.constant 0 : index
    %30 = vector.load %arg8[%c0_21, %c0_22] : memref<8x32xf32, #tpu.memory_space<vmem>>, vector<8x32xf32>
    tpu.vector_store %arg8[%c0_21, %c0_22], %29 {strides = array<i32>} : memref<8x32xf32, #tpu.memory_space<vmem>>, vector<8x32xf32>,
    return
  }
  func.func @transform_0(%arg0: i32) -> (i32, i32) {
    %c0_i32 = arith.constant 0 : i32
    %c0_i32_0 = arith.constant 0 : i32
    return %arg0, %c0_i32 : i32, i32
  }
  func.func @transform_1(%arg0: i32) -> (i32, i32) {
    %c0_i32 = arith.constant 0 : i32
    %c0_i32_0 = arith.constant 0 : i32
    %c0_i32_1 = arith.constant 0 : i32
    return %c0_i32, %c0_i32_0 : i32, i32
  }
  func.func @transform_2(%arg0: i32) -> (i32, i32) {
    %c0_i32 = arith.constant 0 : i32
    %c0_i32_0 = arith.constant 0 : i32
    %c0_i32_1 = arith.constant 0 : i32
    return %c0_i32, %c0_i32_0 : i32, i32
  }
  func.func @transform_3(%arg0: i32) -> (i32, i32) {
    %c0_i32 = arith.constant 0 : i32
    %c0_i32_0 = arith.constant 0 : i32
    %c0_i32_1 = arith.constant 0 : i32
    return %c0_i32, %c0_i32_0 : i32, i32
  }
  func.func @transform_4(%arg0: i32) -> (i32, i32) {
    %c0_i32 = arith.constant 0 : i32
    %c0_i32_0 = arith.constant 0 : i32
    %c0_i32_1 = arith.constant 0 : i32
    return %c0_i32, %c0_i32_0 : i32, i32
  }
  func.func @transform_5(%arg0: i32) -> (i32, i32) {
    %c0_i32 = arith.constant 0 : i32
    %c0_i32_0 = arith.constant 0 : i32
    %c0_i32_1 = arith.constant 0 : i32
    return %c0_i32, %c0_i32_0 : i32, i32
  }
  func.func @transform_6(%arg0: i32) -> (i32, i32) {
    %c0_i32 = arith.constant 0 : i32
    %c0_i32_0 = arith.constant 0 : i32
    return %arg0, %c0_i32 : i32, i32
  }
  func.func @transform_7(%arg0: i32) -> (i32, i32) {
    %c0_i32 = arith.constant 0 : i32
    %c0_i32_0 = arith.constant 0 : i32
    return %arg0, %c0_i32 : i32, i32
  }
}

</mosaic_0001>

<llo_original>
// kernel: adj_atten_agger.1
$region0: #{adj_atten_agger.1}
  #allocation0 [shape = 'u32[]', space=smem, size = 0x4, offset = 0x4, fixed_abs, tag = 'smem constant byte address 0x4 - core index']
  #allocation1 [shape = 'u32[144,128]{1,0:T(1,128)}', space=vmem, size = 0x12000, scoped, tag = 'internal scratch']
  %s0 = inlined_call_operand.vmem [shape: bf16[16,32], index: 0, kind: input, shape index: {}]
  %s1 = inlined_call_operand.vmem [shape: bf16[16,32], index: 1, kind: input, shape index: {}]
  %s2 = inlined_call_operand.vmem [shape: bf16[32,32], index: 2, kind: input, shape index: {}]
  %s3 = inlined_call_operand.vmem [shape: f32[1,32], index: 3, kind: input, shape index: {}]
  %s4 = inlined_call_operand.vmem [shape: bf16[32,32], index: 4, kind: input, shape index: {}]
  %s5 = inlined_call_operand.vmem [shape: f32[1,32], index: 5, kind: input, shape index: {}]
  %s6 = inlined_call_operand.vmem [shape: f32[16,16], index: 6, kind: input, shape index: {}]
  %s7 = inlined_call_operand.hbm [shape: f32[16,32], index: 7, kind: output, shape index: {}]
  %s8 = sld [smem:[#allocation0]]
  $region61: #{adj_atten_agger.1} parent=0
    _
  %s10 = ssub.s32 1, %s8
  %s11 = scalar_select 0, %s10, %s8
  $region1: #{adj_atten_agger.1} parent=0
    #allocation2 [shape = 'u8[8192]{0}', space=vmem, size = 0x2000, scoped, tag = 'output window, operand 0']
    #allocation3 [shape = 's32[2]{0}', space=sflag, size = 0x8, scoped, tag = 'scoped memory for adj_atten_agger.1']
    %12 = vsyncpa [#allocation3], 0
    %s13 = scalar_lea.sflag [#allocation3], 1
    %14 = vsyncpa %s13, 0
    loop: start=0, step=1, limit=4
    $region2: #{adj_atten_agger.1} parent=1 // loop_pre_header
      _
    $region3: #{adj_atten_agger.1} parent=1 // loop_header
      %s16 = sphi 0, %s20
      %p17 = scmp.ge.s32.totalorder %s16, 4
      %s26 = sphi 0, %s28
      %s29 = sphi 0, %s26
      %s30 = sphi 0, %s29
      %s46 = sphi 0, %s30
      %s50 = sphi 0, %s50
      %s52 = sphi 0, %s50
      %s53 = sphi 0, %s52
      %s67 = sphi 0, %s53
      %s71 = sphi 0, %s71
      %s73 = sphi 0, %s71
      %s74 = sphi 0, %s73
      %s88 = sphi 0, %s74
      %s92 = sphi 0, %s92
      %s94 = sphi 0, %s92
      %s95 = sphi 0, %s94
      %s109 = sphi 0, %s95
      %s113 = sphi 0, %s113
      %s115 = sphi 0, %s113
      %s116 = sphi 0, %s115
      %s130 = sphi 0, %s116
      %s134 = sphi 0, %s134
      %s136 = sphi 0, %s134
      %s137 = sphi 0, %s136
      %s151 = sphi 0, %s137
      %s157 = sphi 0, %s159
      %s160 = sphi 0, %s157
      %s161 = sphi 0, %s160
      %s177 = sphi 0, %s161
      %s183 = sphi 0, %s185
      %s186 = sphi 0, %s183
      %s187 = sphi 0, %s186
      %s203 = sphi 0, %s187
    $region4: #{adj_atten_agger.1} parent=1 // loop_header_branch
      %19 = sbr.rel (%p17) target = $region8
    $region5: #{adj_atten_agger.1} parent=1 // loop_body
      %s21 = ssub.s32 %s16, 1
      %s22 = ssub.s32 %s16, 2
      %s23 = sadd.s32 %s16, 1
      %s24 = ssub.s32 %s16, %s23
      %p25 = scmp.eq.s32.totalorder %s24, 0
      %s27 = sadd.s32 %s26, 1
      %s28 = scalar_select %p25, %s26, %s27
      %p31 = pneg %p25
      %p32 = scmp.eq.s32.totalorder %s16, 1
      %p33 = por %p31, %p32
      %p34 = scmp.ne.s32.totalorder %s26, %s29
      %p35 = scmp.eq.s32.totalorder %s16, 0
      %p36 = por %p34, %p35
      %p37 = scmp.ne.s32.totalorder %s26, %s29
      %p38 = scmp.eq.s32.totalorder %s21, 1
      %p39 = por %p37, %p38
      %p40 = scmp.ne.s32.totalorder %s29, %s30
      %p41 = scmp.eq.s32.totalorder %s21, 0
      %p42 = por %p40, %p41
      %p43 = scmp.ne.s32.totalorder %s29, %s30
      %p44 = scmp.eq.s32.totalorder %s22, 1
      %p45 = por %p43, %p44
      %p47 = scmp.ne.s32.totalorder %s30, %s46
      %p48 = scmp.eq.s32.totalorder %s22, 0
      %p49 = por %p47, %p48
      %s51 = sadd.s32 %s50, 1
      %p54 = scmp.eq.s32.totalorder %s16, 1
      %p55 = scmp.ne.s32.totalorder %s50, %s52
      %p56 = scmp.eq.s32.totalorder %s16, 0
      %p57 = por %p55, %p56
      %p58 = scmp.ne.s32.totalorder %s50, %s52
      %p59 = scmp.eq.s32.totalorder %s21, 1
      %p60 = por %p58, %p59
      %p61 = scmp.ne.s32.totalorder %s52, %s53
      %p62 = scmp.eq.s32.totalorder %s21, 0
      %p63 = por %p61, %p62
      %p64 = scmp.ne.s32.totalorder %s52, %s53
      %p65 = scmp.eq.s32.totalorder %s22, 1
      %p66 = por %p64, %p65
      %p68 = scmp.ne.s32.totalorder %s53, %s67
      %p69 = scmp.eq.s32.totalorder %s22, 0
      %p70 = por %p68, %p69
      %s72 = sadd.s32 %s71, 1
      %p75 = scmp.eq.s32.totalorder %s16, 1
      %p76 = scmp.ne.s32.totalorder %s71, %s73
      %p77 = scmp.eq.s32.totalorder %s16, 0
      %p78 = por %p76, %p77
      %p79 = scmp.ne.s32.totalorder %s71, %s73
      %p80 = scmp.eq.s32.totalorder %s21, 1
      %p81 = por %p79, %p80
      %p82 = scmp.ne.s32.totalorder %s73, %s74
      %p83 = scmp.eq.s32.totalorder %s21, 0
      %p84 = por %p82, %p83
      %p85 = scmp.ne.s32.totalorder %s73, %s74
      %p86 = scmp.eq.s32.totalorder %s22, 1
      %p87 = por %p85, %p86
      %p89 = scmp.ne.s32.totalorder %s74, %s88
      %p90 = scmp.eq.s32.totalorder %s22, 0
      %p91 = por %p89, %p90
      %s93 = sadd.s32 %s92, 1
      %p96 = scmp.eq.s32.totalorder %s16, 1
      %p97 = scmp.ne.s32.totalorder %s92, %s94
      %p98 = scmp.eq.s32.totalorder %s16, 0
      %p99 = por %p97, %p98
      %p100 = scmp.ne.s32.totalorder %s92, %s94
      %p101 = scmp.eq.s32.totalorder %s21, 1
      %p102 = por %p100, %p101
      %p103 = scmp.ne.s32.totalorder %s94, %s95
      %p104 = scmp.eq.s32.totalorder %s21, 0
      %p105 = por %p103, %p104
      %p106 = scmp.ne.s32.totalorder %s94, %s95
      %p107 = scmp.eq.s32.totalorder %s22, 1
      %p108 = por %p106, %p107
      %p110 = scmp.ne.s32.totalorder %s95, %s109
      %p111 = scmp.eq.s32.totalorder %s22, 0
      %p112 = por %p110, %p111
      %s114 = sadd.s32 %s113, 1
      %p117 = scmp.eq.s32.totalorder %s16, 1
      %p118 = scmp.ne.s32.totalorder %s113, %s115
      %p119 = scmp.eq.s32.totalorder %s16, 0
      %p120 = por %p118, %p119
      %p121 = scmp.ne.s32.totalorder %s113, %s115
      %p122 = scmp.eq.s32.totalorder %s21, 1
      %p123 = por %p121, %p122
      %p124 = scmp.ne.s32.totalorder %s115, %s116
      %p125 = scmp.eq.s32.totalorder %s21, 0
      %p126 = por %p124, %p125
      %p127 = scmp.ne.s32.totalorder %s115, %s116
      %p128 = scmp.eq.s32.totalorder %s22, 1
      %p129 = por %p127, %p128
      %p131 = scmp.ne.s32.totalorder %s116, %s130
      %p132 = scmp.eq.s32.totalorder %s22, 0
      %p133 = por %p131, %p132
      %s135 = sadd.s32 %s134, 1
      %p138 = scmp.eq.s32.totalorder %s16, 1
      %p139 = scmp.ne.s32.totalorder %s134, %s136
      %p140 = scmp.eq.s32.totalorder %s16, 0
      %p141 = por %p139, %p140
      %p142 = scmp.ne.s32.totalorder %s134, %s136
      %p143 = scmp.eq.s32.totalorder %s21, 1
      %p144 = por %p142, %p143
      %p145 = scmp.ne.s32.totalorder %s136, %s137
      %p146 = scmp.eq.s32.totalorder %s21, 0
      %p147 = por %p145, %p146
      %p148 = scmp.ne.s32.totalorder %s136, %s137
      %p149 = scmp.eq.s32.totalorder %s22, 1
      %p150 = por %p148, %p149
      %p152 = scmp.ne.s32.totalorder %s137, %s151
      %p153 = scmp.eq.s32.totalorder %s22, 0
      %p154 = por %p152, %p153
      %s155 = ssub.s32 %s16, %s23
      %p156 = scmp.eq.s32.totalorder %s155, 0
      %s158 = sadd.s32 %s157, 1
      %s159 = scalar_select %p156, %s157, %s158
      %p162 = pneg %p156
      %p163 = scmp.eq.s32.totalorder %s16, 1
      %p164 = por %p162, %p163
      %p165 = scmp.ne.s32.totalorder %s157, %s160
      %p166 = scmp.eq.s32.totalorder %s16, 0
      %p167 = por %p165, %p166
      %p168 = scmp.ne.s32.totalorder %s157, %s160
      %p169 = scmp.eq.s32.totalorder %s21, 1
      %p170 = por %p168, %p169
      %p171 = scmp.ne.s32.totalorder %s160, %s161
      %p172 = scmp.eq.s32.totalorder %s21, 0
      %p173 = por %p171, %p172
      %p174 = scmp.ne.s32.totalorder %s160, %s161
      %p175 = scmp.eq.s32.totalorder %s22, 1
      %p176 = por %p174, %p175
      %p178 = scmp.ne.s32.totalorder %s161, %s177
      %p179 = scmp.eq.s32.totalorder %s22, 0
      %p180 = por %p178, %p179
      %s181 = ssub.s32 %s16, %s23
      %p182 = scmp.eq.s32.totalorder %s181, 0
      %s184 = sadd.s32 %s183, 1
      %s185 = scalar_select %p182, %s183, %s184
      %p188 = pneg %p182
      %p189 = scmp.eq.s32.totalorder %s16, 1
      %p190 = por %p188, %p189
      %p191 = scmp.ne.s32.totalorder %s183, %s186
      %p192 = scmp.eq.s32.totalorder %s16, 0
      %p193 = por %p191, %p192
      %p194 = scmp.ne.s32.totalorder %s183, %s186
      %p195 = scmp.eq.s32.totalorder %s21, 1
      %p196 = por %p194, %p195
      %p197 = scmp.ne.s32.totalorder %s186, %s187
      %p198 = scmp.eq.s32.totalorder %s21, 0
      %p199 = por %p197, %p198
      %p200 = scmp.ne.s32.totalorder %s186, %s187
      %p201 = scmp.eq.s32.totalorder %s22, 1
      %p202 = por %p200, %p201
      %p204 = scmp.ne.s32.totalorder %s187, %s203
      %p205 = scmp.eq.s32.totalorder %s22, 0
      %p206 = por %p204, %p205
      %p207 = scmp.le.s32.totalorder 1, %s16
      %p208 = scmp.lt.s32.totalorder %s16, 3
      %p209 = pnand %p207, %p208
      %p210 = pneg %p209
      // Predicated region
      $region9: #{adj_atten_agger.1} parent=5 // pred_check
        _
      $region10: #{adj_atten_agger.1} parent=5 // pred_check_branch
        %212 = sbr.rel (%p209) target = $region12
      $region11: #{adj_atten_agger.1} parent=5 // pred_region
        %s213 = ssub.s32 %s16, 1
        // Predicated region
        $region13: #{adj_atten_agger.1} parent=11 // pred_check
          %p214 = pneg %p63
        $region14: #{adj_atten_agger.1} parent=11 // pred_check_branch
          %216 = sbr.rel (%p214) target = $region16
        $region15: #{adj_atten_agger.1} parent=11 // pred_region
          _
        $region16: #{adj_atten_agger.1} parent=11 // pred_fallthru
          _
        // Predicated region
        $region17: #{adj_atten_agger.1} parent=11 // pred_check
          %p217 = pneg %p84
        $region18: #{adj_atten_agger.1} parent=11 // pred_check_branch
          %219 = sbr.rel (%p217) target = $region20
        $region19: #{adj_atten_agger.1} parent=11 // pred_region
          _
        $region20: #{adj_atten_agger.1} parent=11 // pred_fallthru
          _
        // Predicated region
        $region21: #{adj_atten_agger.1} parent=11 // pred_check
          %p220 = pneg %p105
        $region22: #{adj_atten_agger.1} parent=11 // pred_check_branch
          %222 = sbr.rel (%p220) target = $region24
        $region23: #{adj_atten_agger.1} parent=11 // pred_region
          _
        $region24: #{adj_atten_agger.1} parent=11 // pred_fallthru
          _
        // Predicated region
        $region25: #{adj_atten_agger.1} parent=11 // pred_check
          %p223 = pneg %p126
        $region26: #{adj_atten_agger.1} parent=11 // pred_check_branch
          %225 = sbr.rel (%p223) target = $region28
        $region27: #{adj_atten_agger.1} parent=11 // pred_region
          _
        $region28: #{adj_atten_agger.1} parent=11 // pred_fallthru
          _
        // Predicated region
        $region29: #{adj_atten_agger.1} parent=11 // pred_check
          %p226 = pneg %p147
        $region30: #{adj_atten_agger.1} parent=11 // pred_check_branch
          %228 = sbr.rel (%p226) target = $region32
        $region31: #{adj_atten_agger.1} parent=11 // pred_region
          _
        $region32: #{adj_atten_agger.1} parent=11 // pred_fallthru
          _
      $region12: #{adj_atten_agger.1} parent=5 // pred_fallthru
        _
      %p229 = scmp.lt.s32.totalorder %s16, 2
      // Predicated region
      $region33: #{adj_atten_agger.1} parent=5 // pred_check
        %p230 = pneg %p229
      $region34: #{adj_atten_agger.1} parent=5 // pred_check_branch
        %232 = sbr.rel (%p230) target = $region36
      $region35: #{adj_atten_agger.1} parent=5 // pred_region
        // Predicated region
        $region37: #{adj_atten_agger.1} parent=35 // pred_check
          %p233 = pneg %p36
        $region38: #{adj_atten_agger.1} parent=35 // pred_check_branch
          %235 = sbr.rel (%p233) target = $region40
        $region39: #{adj_atten_agger.1} parent=35 // pred_region
          %p236 = scmp.lt.s32.totalorder %s16, 1
          %s237 = scalar_select %p236, %s16, 1
          %s238 = smul.addr %s237, 4
          %s239 = scalar_lea.vmem %s0, %s238
        $region40: #{adj_atten_agger.1} parent=35 // pred_fallthru
          _
        // Predicated region
        $region41: #{adj_atten_agger.1} parent=35 // pred_check
          %p240 = pneg %p167
        $region42: #{adj_atten_agger.1} parent=35 // pred_check_branch
          %242 = sbr.rel (%p240) target = $region44
        $region43: #{adj_atten_agger.1} parent=35 // pred_region
          %p243 = scmp.lt.s32.totalorder %s16, 1
          %s244 = scalar_select %p243, %s16, 1
          %s245 = smul.addr %s244, 8
          %s246 = scalar_lea.vmem %s6, %s245
        $region44: #{adj_atten_agger.1} parent=35 // pred_fallthru
          _
      $region36: #{adj_atten_agger.1} parent=5 // pred_fallthru
        _
      %p247 = scmp.le.s32.totalorder 1, %s16
      %p248 = scmp.lt.s32.totalorder %s16, 3
      %p249 = pnand %p247, %p248
      %p250 = pneg %p249
      // Predicated region
      $region45: #{adj_atten_agger.1} parent=5 // pred_check
        _
      $region46: #{adj_atten_agger.1} parent=5 // pred_check_branch
        %252 = sbr.rel (%p249) target = $region48
      $region47: #{adj_atten_agger.1} parent=5 // pred_region
        %s253 = ssub.s32 %s16, 1
        %p254 = scmp.lt.s32.totalorder %s21, 1
        %s255 = scalar_select %p254, %s21, 1
        %s256 = smul.addr %s255, 4
        %s257 = scalar_lea.vmem %s0, %s256
        %p258 = pneg %p42
        %p259 = pneg %p39
        %p260 = pneg %p63
        %p261 = pneg %p60
        %p262 = pneg %p84
        %p263 = pneg %p81
        %p264 = pneg %p105
        %p265 = pneg %p102
        %p266 = pneg %p126
        %p267 = pneg %p123
        %p268 = pneg %p147
        %p269 = pneg %p144
        %p270 = scmp.lt.s32.totalorder %s21, 1
        %s271 = scalar_select %p270, %s21, 1
        %s272 = smul.addr %s271, 8
        %s273 = scalar_lea.vmem %s6, %s272
        %p274 = pneg %p173
        %p275 = pneg %p170
        %p276 = pneg %p199
        %p277 = pneg %p196
        %s278 = sand.u32 %s186, 1
        %s279 = scalar_lea.sflag [#allocation3], %s278
        %s280 = sand.u32 %s186, 1
        %s281 = smul.addr %s280, 8
        %s282 = scalar_lea.vmem [#allocation2], %s281
        %p283 = scmp.lt.s32.totalorder %s21, 1
        %s284 = scalar_select %p283, %s21, 1
        %s285 = smul.addr %s284, 4
        %s286 = scalar_lea.vmem %s0, %s285
        %p287 = scmp.lt.s32.totalorder %s21, 1
        %s288 = scalar_select %p287, %s21, 1
        %s289 = smul.addr %s288, 8
        %s290 = scalar_lea.vmem %s6, %s289
        %v292 = vld [vmem:[%s286] sm:$0xf]
        %v293 = vld [vmem:[%s2] sm:$0xf]
        %v294 = vld [vmem:[%s2 + $0x4] sm:$0xf]
        %v295 = vld [vmem:[%s2 + $0x8] sm:$0xf]
        %v296 = vld [vmem:[%s2 + $0xc] sm:$0xf]
        %v297 = vld [vmem:[%s3] sm:$0x1]
        %v299 = vlaneseq
        %v300 = vshrl.u32 %v299, 7
        %v301 = vsub.s32 0, %v300
        %v302 = vrot.slane %v297, %v301
        %v308 = vunpack.c.l.b16 %v293
        %v309 = vunpack.c.l.b16 %v294
        %v310 = vunpack.c.l.b16 %v295
        %v311 = vunpack.c.l.b16 %v296
        %v312 = vpack.c.b16 %v309, %v308
        %v313 = vpack.c.b16 %v311, %v310
        %vm316 = vcmask 261120
        %v318 = vsel %vm316, %v292, 0
        %320 = vmatprep.subr.bf16.mxu0 0
        %321 = vmatpush1.bf16.msra.mxu0 %v312
        %322 = vmatprep.subr.bf16.mxu0 0
        %323 = vmatpush1.bf16.msra.mxu0 %v313
        %324 = vmatprep.subr.bf16.mxu0 0
        %325 = vmatpush1.bf16.msra.mxu0 0
        %326 = vmatprep.subr.bf16.mxu0 0
        %327 = vmatpush1.bf16.msra.mxu0 0
        %328 = vmatprep.subr.bf16.mxu0 0
        %329 = vmatpush1.bf16.msra.mxu0 0
        %330 = vmatprep.subr.bf16.mxu0 0
        %331 = vmatpush1.bf16.msra.mxu0 0
        %332 = vmatprep.subr.bf16.mxu0 0
        %333 = vmatpush1.bf16.msra.mxu0 0
        %334 = vmatprep.subr.bf16.mxu0 0
        %335 = vmatpush1.bf16.msra.mxu0 0
        %336 = vmatprep.subr.bf16.mxu0 0
        %337 = vmatpush1.bf16.msra.mxu0 0
        %338 = vmatprep.subr.bf16.mxu0 0
        %339 = vmatpush1.bf16.msra.mxu0 0
        %340 = vmatprep.subr.bf16.mxu0 0
        %341 = vmatpush1.bf16.msra.mxu0 0
        %342 = vmatprep.subr.bf16.mxu0 0
        %343 = vmatpush1.bf16.msra.mxu0 0
        %344 = vmatprep.subr.bf16.mxu0 0
        %345 = vmatpush1.bf16.msra.mxu0 0
        %346 = vmatprep.subr.bf16.mxu0 0
        %347 = vmatpush1.bf16.msra.mxu0 0
        %348 = vmatprep.subr.bf16.mxu0 0
        %349 = vmatpush1.bf16.msra.mxu0 0
        %350 = vmatprep.subr.bf16.mxu0 0
        %351 = vmatpush1.bf16.msra.mxu0 0
        %352 = vmatprep.mubr.bf16.mxu0 0
        %353 = vmatmul.mubr.bf16.gmra.mrb[0].mxu0 %v318
        %v354 = vpop.f32.mrb[0].mxu0
        %v355 = vadd.f32 %v302, %v354
        %v356 = vpop.f32.mrb[0].mxu0
        %v357 = vpop.f32.mrb[0].mxu0
        %v358 = vpop.f32.mrb[0].mxu0
        %359 = vdwg.mxu0
        %v360 = vmul.f32 %v355, 0.17677669
        %v361 = vld [vmem:[%s1] sm:$0xf]
        %v362 = vld [vmem:[%s1 + $0x4] sm:$0xf]
        %v363 = vld [vmem:[%s4] sm:$0xf]
        %v364 = vld [vmem:[%s4 + $0x4] sm:$0xf]
        %v365 = vld [vmem:[%s4 + $0x8] sm:$0xf]
        %v366 = vld [vmem:[%s4 + $0xc] sm:$0xf]
        %v367 = vld [vmem:[%s5] sm:$0x1]
        %v369 = vlaneseq
        %v370 = vshrl.u32 %v369, 7
        %v371 = vsub.s32 0, %v370
        %v372 = vrot.slane %v367, %v371
        %v376 = vunpack.c.l.b16 %v361
        %v377 = vunpack.c.l.b16 %v362
        %v378 = vpack.c.b16 %v377, %v376
        %v383 = vunpack.c.l.b16 %v363
        %v384 = vunpack.c.l.b16 %v364
        %v385 = vunpack.c.l.b16 %v365
        %v386 = vunpack.c.l.b16 %v366
        %v387 = vpack.c.b16 %v384, %v383
        %v388 = vpack.c.b16 %v386, %v385
        %v392 = vsel %vm316, %v378, 0
        %394 = vmatprep.subr.bf16.mxu0 0
        %395 = vmatpush1.bf16.msra.mxu0 %v387
        %396 = vmatprep.subr.bf16.mxu0 0
        %397 = vmatpush1.bf16.msra.mxu0 %v388
        %398 = vmatprep.subr.bf16.mxu0 0
        %399 = vmatpush1.bf16.msra.mxu0 0
        %400 = vmatprep.subr.bf16.mxu0 0
        %401 = vmatpush1.bf16.msra.mxu0 0
        %402 = vmatprep.subr.bf16.mxu0 0
        %403 = vmatpush1.bf16.msra.mxu0 0
        %404 = vmatprep.subr.bf16.mxu0 0
        %405 = vmatpush1.bf16.msra.mxu0 0
        %406 = vmatprep.subr.bf16.mxu0 0
        %407 = vmatpush1.bf16.msra.mxu0 0
        %408 = vmatprep.subr.bf16.mxu0 0
        %409 = vmatpush1.bf16.msra.mxu0 0
        %410 = vmatprep.subr.bf16.mxu0 0
        %411 = vmatpush1.bf16.msra.mxu0 0
        %412 = vmatprep.subr.bf16.mxu0 0
        %413 = vmatpush1.bf16.msra.mxu0 0
        %414 = vmatprep.subr.bf16.mxu0 0
        %415 = vmatpush1.bf16.msra.mxu0 0
        %416 = vmatprep.subr.bf16.mxu0 0
        %417 = vmatpush1.bf16.msra.mxu0 0
        %418 = vmatprep.subr.bf16.mxu0 0
        %419 = vmatpush1.bf16.msra.mxu0 0
        %420 = vmatprep.subr.bf16.mxu0 0
        %421 = vmatpush1.bf16.msra.mxu0 0
        %422 = vmatprep.subr.bf16.mxu0 0
        %423 = vmatpush1.bf16.msra.mxu0 0
        %424 = vmatprep.subr.bf16.mxu0 0
        %425 = vmatpush1.bf16.msra.mxu0 0
        %426 = vmatprep.mubr.bf16.mxu0 0
        %427 = vmatmul.mubr.bf16.gmra.mrb[0].mxu0 %v392
        %v428 = vpop.f32.mrb[0].mxu0
        %v429 = vadd.f32 %v372, %v428
        %v430 = vpop.f32.mrb[0].mxu0
        %v431 = vpop.f32.mrb[0].mxu0
        %v432 = vadd.f32 %v372, %v431
        %v433 = vpop.f32.mrb[0].mxu0
        %434 = vdwg.mxu0
        %v435 = vld [vmem:[%s290] sm:$0xff]
        %v437 = vsel %vm316, %v360, 0
        %v440 = vsel %vm316, %v429, 0
        %v443 = vsel %vm316, %v432, 0
        %445 = vmatprep.subr.mxu0 0.0
        %446 = vmatpush1.xpose.msra.mxu0 %v440
        %447 = vmatprep.subr.mxu0 0.0
        %448 = vmatpush1.xpose.msra.mxu0 %v443
        %449 = vmatprep.subr.mxu0 0.0
        %450 = vmatpush1.xpose.msra.mxu0 0.0
        %451 = vmatprep.subr.mxu0 0.0
        %452 = vmatpush1.xpose.msra.mxu0 0.0
        %453 = vmatprep.subr.mxu0 0.0
        %454 = vmatpush1.xpose.msra.mxu0 0.0
        %455 = vmatprep.subr.mxu0 0.0
        %456 = vmatpush1.xpose.msra.mxu0 0.0
        %457 = vmatprep.subr.mxu0 0.0
        %458 = vmatpush1.xpose.msra.mxu0 0.0
        %459 = vmatprep.subr.mxu0 0.0
        %460 = vmatpush1.xpose.msra.mxu0 0.0
        %461 = vmatprep.subr.mxu0 0.0
        %462 = vmatpush1.xpose.msra.mxu0 0.0
        %463 = vmatprep.subr.mxu0 0.0
        %464 = vmatpush1.xpose.msra.mxu0 0.0
        %465 = vmatprep.subr.mxu0 0.0
        %466 = vmatpush1.xpose.msra.mxu0 0.0
        %467 = vmatprep.subr.mxu0 0.0
        %468 = vmatpush1.xpose.msra.mxu0 0.0
        %469 = vmatprep.subr.mxu0 0.0
        %470 = vmatpush1.xpose.msra.mxu0 0.0
        %471 = vmatprep.subr.mxu0 0.0
        %472 = vmatpush1.xpose.msra.mxu0 0.0
        %473 = vmatprep.subr.mxu0 0.0
        %474 = vmatpush1.xpose.msra.mxu0 0.0
        %475 = vmatprep.subr.mxu0 0.0
        %476 = vmatpush1.xpose.msra.mxu0 0.0
        %477 = vmatprep.subr.mxu0 0.0
        %478 = vmatpush1.xpose.msra.mxu0 0.0
        %479 = vmatprep.subr.mxu0 0.0
        %480 = vmatpush1.xpose.msra.mxu0 0.0
        %481 = vmatprep.subr.mxu0 0.0
        %482 = vmatpush1.xpose.msra.mxu0 0.0
        %483 = vmatprep.subr.mxu0 0.0
        %484 = vmatpush1.xpose.msra.mxu0 0.0
        %485 = vmatprep.subr.mxu0 0.0
        %486 = vmatpush1.xpose.msra.mxu0 0.0
        %487 = vmatprep.subr.mxu0 0.0
        %488 = vmatpush1.xpose.msra.mxu0 0.0
        %489 = vmatprep.subr.mxu0 0.0
        %490 = vmatpush1.xpose.msra.mxu0 0.0
        %491 = vmatprep.subr.mxu0 0.0
        %492 = vmatpush1.xpose.msra.mxu0 0.0
        %493 = vmatprep.subr.mxu0 0.0
        %494 = vmatpush1.xpose.msra.mxu0 0.0
        %495 = vmatprep.subr.mxu0 0.0
        %496 = vmatpush1.xpose.msra.mxu0 0.0
        %497 = vmatprep.subr.mxu0 0.0
        %498 = vmatpush1.xpose.msra.mxu0 0.0
        %499 = vmatprep.subr.mxu0 0.0
        %500 = vmatpush1.xpose.msra.mxu0 0.0
        %501 = vmatprep.subr.mxu0 0.0
        %502 = vmatpush1.xpose.msra.mxu0 0.0
        %503 = vmatprep.subr.mxu0 0.0
        %504 = vmatpush1.xpose.msra.mxu0 0.0
        %505 = vmatprep.subr.mxu0 0.0
        %506 = vmatpush1.xpose.msra.mxu0 0.0
        %507 = vmatprep.subr.mxu0 0.0
        %508 = vmatpush1.xpose.msra.mxu0 0.0
        %509 = vmatprep.mubr.f32.mxu0 0.0
        %510 = vmatmul.mubr.f32.gmra.mrb[0].mxu0 %v437
        %v511 = vpop.f32.mrb[0].mxu0
        %v512 = vadd.f32 %v435, %v511
        %v513 = vpop.f32.mrb[0].mxu0
        %514 = vdwg.mxu0
        %vm515 = vcmask 130048
        %v516 = vsel %vm515, %v512, -inf
        %517 = vmax.xlane.f32.xlu0 %v516
        %v518 = vpop.xlane.xlu0 %517
        %v519 = vsub.f32 %v512, %v518
        %v520 = vmul.f32 %v519, 1.442695
        %v521 = vpow.pop %v520
        %v522 = vsel %vm515, %v521, 0.0
        %523 = vadd.xlane.f32.xlu0 %v522
        %v524 = vpop.xlane.xlu0 %523
        %v525 = vrcp.pop %v524
        %v526 = vmul.f32 %v521, %v525
        %v527 = vpack.c.bf16 %v526, %v526
        %v530 = vsel %vm515, %v527, 0
        %532 = vmatprep.subr.bf16.mxu0 0
        %533 = vmatpush1.bf16.msra.mxu0 %v378
        %534 = vmatprep.subr.bf16.mxu0 0
        %535 = vmatpush1.bf16.msra.mxu0 0
        %536 = vmatprep.subr.bf16.mxu0 0
        %537 = vmatpush1.bf16.msra.mxu0 0
        %538 = vmatprep.subr.bf16.mxu0 0
        %539 = vmatpush1.bf16.msra.mxu0 0
        %540 = vmatprep.subr.bf16.mxu0 0
        %541 = vmatpush1.bf16.msra.mxu0 0
        %542 = vmatprep.subr.bf16.mxu0 0
        %543 = vmatpush1.bf16.msra.mxu0 0
        %544 = vmatprep.subr.bf16.mxu0 0
        %545 = vmatpush1.bf16.msra.mxu0 0
        %546 = vmatprep.subr.bf16.mxu0 0
        %547 = vmatpush1.bf16.msra.mxu0 0
        %548 = vmatprep.subr.bf16.mxu0 0
        %549 = vmatpush1.bf16.msra.mxu0 0
        %550 = vmatprep.subr.bf16.mxu0 0
        %551 = vmatpush1.bf16.msra.mxu0 0
        %552 = vmatprep.subr.bf16.mxu0 0
        %553 = vmatpush1.bf16.msra.mxu0 0
        %554 = vmatprep.subr.bf16.mxu0 0
        %555 = vmatpush1.bf16.msra.mxu0 0
        %556 = vmatprep.subr.bf16.mxu0 0
        %557 = vmatpush1.bf16.msra.mxu0 0
        %558 = vmatprep.subr.bf16.mxu0 0
        %559 = vmatpush1.bf16.msra.mxu0 0
        %560 = vmatprep.subr.bf16.mxu0 0
        %561 = vmatpush1.bf16.msra.mxu0 0
        %562 = vmatprep.subr.bf16.mxu0 0
        %563 = vmatpush1.bf16.msra.mxu0 0
        %564 = vmatprep.mubr.bf16.mxu0 0
        %565 = vmatmul.mubr.bf16.gmra.mrb[0].mxu0 %v530
        %v566 = vpop.f32.mrb[0].mxu0
        %v567 = vadd.f32 0.0, %v566
        %v568 = vpop.f32.mrb[0].mxu0
        %v569 = vpop.f32.mrb[0].mxu0
        %v570 = vpop.f32.mrb[0].mxu0
        %571 = vdwg.mxu0
        %572 = vst.msk [vmem:[%s282] sm:$0xff] %vm316, %v567
        %s573 = sand.u32 %s186, 1
        %s574 = scalar_lea.sflag [#allocation3], %s573
        %s575 = sand.u32 %s186, 1
        %s576 = smul.addr %s575, 8
        %s577 = scalar_lea.vmem [#allocation2], %s576
        // Predicated region
        $region49: #{adj_atten_agger.1} parent=47 // pred_check
          %p578 = pneg %p196
        $region50: #{adj_atten_agger.1} parent=47 // pred_check_branch
          %580 = sbr.rel (%p578) target = $region52
        $region51: #{adj_atten_agger.1} parent=47 // pred_region
          %s582 = ssub.s32 128, 128
          %583 = vsyncadd %s574, %s582
          %s584 = smul.addr %s21, 128
          %s585 = scalar_lea.hbm %s7, %s584
          %s587 = sshll.u32 %s577, 4
          %s588 = int_to_ptr.vmem [resolvable:$true] %s587
          %590 = dma.vmem_to_hbm [thread:$0]  %s588, 128, %s585, %s574
        $region52: #{adj_atten_agger.1} parent=47 // pred_fallthru
          _
      $region48: #{adj_atten_agger.1} parent=5 // pred_fallthru
        _
      %p591 = scmp.le.s32.totalorder 2, %s16
      // Predicated region
      $region53: #{adj_atten_agger.1} parent=5 // pred_check
        %p592 = pneg %p591
      $region54: #{adj_atten_agger.1} parent=5 // pred_check_branch
        %594 = sbr.rel (%p592) target = $region56
      $region55: #{adj_atten_agger.1} parent=5 // pred_region
        %s595 = ssub.s32 %s16, 2
        // Predicated region
        $region57: #{adj_atten_agger.1} parent=55 // pred_check
          %p596 = pneg %p202
        $region58: #{adj_atten_agger.1} parent=55 // pred_check_branch
          %598 = sbr.rel (%p596) target = $region60
        $region59: #{adj_atten_agger.1} parent=55 // pred_region
          %s599 = sand.u32 %s187, 1
          %s600 = scalar_lea.sflag [#allocation3], %s599
          %s601 = sand.u32 %s187, 1
          %s602 = smul.addr %s601, 8
          %s603 = scalar_lea.vmem [#allocation2], %s602
          %604 = dma.done %s600, 128
        $region60: #{adj_atten_agger.1} parent=55 // pred_fallthru
          _
      $region56: #{adj_atten_agger.1} parent=5 // pred_fallthru
        _
    $region6: #{adj_atten_agger.1} parent=1 // loop_footer
      %s20 = sadd.s32 1, %s16
    $region7: #{adj_atten_agger.1} parent=1 // loop_footer_branch
      %15 = sbr.rel target = $region3
    $region8: #{adj_atten_agger.1} parent=1 // loop_exit
      _
    %605 = vsyncpa [#allocation3], 1
    %s606 = scalar_lea.sflag [#allocation3], 1
    %607 = vsyncpa %s606, 1

</llo_original>
